<compile_context>
chip_gen: v6e
topology: v6e:2x2x1
jax: 0.10.0
libtpu: 0.0.40
codegen_flags: <defaults>
</compile_context>

<pallas_src>
import jax
import jax.numpy as jnp
from jax import lax
from jax.experimental import pallas as pl
from jax.experimental.pallas import tpu as pltpu

H = 64          # hidden size
T = 40          # sequence length (from x.view(-1, 40))
NCLASS = 3
UNROLL = 4      # time steps per fori_loop group (T % UNROLL == 0)


def net_kernel(x_ref, wih0_ref, b0_ref, wbig_ref, b1_ref, fcw_ref, fcb_ref,
               out_ref):
    # x_ref:    (T*B, 1)   time-major flattened input (row t*B + b = x[b, t])
    # wih0_ref: (1, 4H)    layer-0 input weights, gate order [i,f,o,g], 0.5-folded
    # b0_ref:   (1, 4H)    fused layer-0 bias, 0.5-folded on i/f/o
    # wbig_ref: (2H, 8H)   fused per-step weight (see header), 0.5-folded on i/f/o
    # b1_ref:   (1, 4H)    fused layer-1 bias, 0.5-folded on i/f/o
    # fcw_ref:  (H, 3), fcb_ref: (1, 3)
    B = out_ref.shape[0]

    def cell(gates, c):
        # gate order [i, f, o, g]; 0.5 pre-scale already folded into i/f/o
        # columns host-side, so a single tanh over the full (B, 4H) slab gives
        # sigmoid (0.5*t + 0.5) for i/f/o and tanh for g.
        t = jnp.tanh(gates)
        sig = 0.5 * t[:, :3 * H] + 0.5
        i = sig[:, 0 * H:1 * H]
        f = sig[:, 1 * H:2 * H]
        o = sig[:, 2 * H:3 * H]
        g = t[:, 3 * H:4 * H]
        c_new = f * c + i * g
        h_new = o * jnp.tanh(c_new)
        return h_new, c_new

    zeros_h = jnp.zeros((B, H), jnp.float32)
    carry0 = (jnp.zeros((B, 4 * H), jnp.float32),  # rec0: h0 @ W_hh0 for the next step (h0_init = 0)
              zeros_h,                              # c0
              zeros_h,                              # h1 (= h1_{t-1} for the concat)
              zeros_h)                              # c1

    def group(gi, carry):
        rec0, c0, h1, c1 = carry
        base = pl.multiple_of(gi * (UNROLL * B), UNROLL * B)
        # Layer-0 input projection for this group's UNROLL steps.  Depends only
        # on x, so the scheduler overlaps it with the compute of earlier steps.
        g0_chunk = (x_ref[pl.ds(base, UNROLL * B), :] * wih0_ref[...]
                    + b0_ref[...])                                  # (UNROLL*B, 4H)
        for u in range(UNROLL):
            # layer 0: precomputed input term + recurrent term from last step's
            # fused matmul
            g0 = g0_chunk[u * B:(u + 1) * B, :] + rec0
            h0, c0 = cell(g0, c0)
            # single fused matmul: K = 2H = 128, N = 8H = 512
            big = jnp.dot(jnp.concatenate([h0, h1], axis=1), wbig_ref[...],
                          preferred_element_type=jnp.float32)       # (B, 8H)
            h1, c1 = cell(big[:, :4 * H] + b1_ref[...], c1)
            rec0 = big[:, 4 * H:]                                   # layer-0 rec term for t+1
        return rec0, c0, h1, c1

    _, _, h1, _ = lax.fori_loop(0, T // UNROLL, group, carry0)

    # lstm_out[:, -1, :] -> ReLU -> fc -> softmax(dim=1)
    h = jnp.maximum(h1, 0.0)
    logits = (jnp.dot(h, fcw_ref[...], preferred_element_type=jnp.float32)
              + fcb_ref[...])
    m = jnp.max(logits, axis=1, keepdims=True)
    e = jnp.exp(logits - m)
    out_ref[...] = e / jnp.sum(e, axis=1, keepdims=True)


def init_params(key):
    """Deterministic init with PyTorch parameter shapes: LSTM(1->64, 2 layers), Linear(64,3)."""
    ks = jax.random.split(key, 10)
    s = 1.0 / jnp.sqrt(jnp.float32(H))

    def u(k, shape):
        return jax.random.uniform(k, shape, jnp.float32, -s, s)

    w_ih_l0 = u(ks[0], (4 * H, 1))
    w_hh_l0 = u(ks[1], (4 * H, H))
    b_ih_l0 = u(ks[2], (4 * H,))
    b_hh_l0 = u(ks[3], (4 * H,))
    w_ih_l1 = u(ks[4], (4 * H, H))
    w_hh_l1 = u(ks[5], (4 * H, H))
    b_ih_l1 = u(ks[6], (4 * H,))
    b_hh_l1 = u(ks[7], (4 * H,))
    fc_w = u(ks[8], (NCLASS, H))
    fc_b = u(ks[9], (NCLASS,))
    return (w_ih_l0, w_hh_l0, b_ih_l0, b_hh_l0,
            w_ih_l1, w_hh_l1, b_ih_l1, b_hh_l1, fc_w, fc_b)


def pack_params(torch_params):
    """Host-side repack: transpose to (in, 4H), fuse biases, reorder gates
    [i,f,g,o]->[i,f,o,g], fold the sigmoid 0.5 pre-scale into the i/f/o
    columns, and build the fused per-step weight W_big (2H, 8H)."""
    (w_ih_l0, w_hh_l0, b_ih_l0, b_hh_l0,
     w_ih_l1, w_hh_l1, b_ih_l1, b_hh_l1, fc_w, fc_b) = torch_params

    perm = jnp.concatenate([jnp.arange(0, 2 * H),
                            jnp.arange(3 * H, 4 * H),
                            jnp.arange(2 * H, 3 * H)])
    # 0.5 pre-scale on the sigmoid (i/f/o) gate columns (first 3H after perm)
    gate_scale = jnp.concatenate([jnp.full((3 * H,), 0.5, jnp.float32),
                                  jnp.ones((H,), jnp.float32)])

    wih0 = w_ih_l0.T[:, perm] * gate_scale                             # (1, 4H)
    b0 = ((b_ih_l0 + b_hh_l0)[perm] * gate_scale)[None, :]             # (1, 4H)
    whh0 = w_hh_l0.T[:, perm] * gate_scale                             # (H, 4H)
    w1 = jnp.concatenate([w_ih_l1.T, w_hh_l1.T], axis=0)[:, perm] * gate_scale  # (2H, 4H)
    b1 = ((b_ih_l1 + b_hh_l1)[perm] * gate_scale)[None, :]             # (1, 4H)

    # W_big: cols 0:4H -> layer-1 gates for step t ([h0_t | h1_{t-1}] @ w1)
    #        cols 4H:8H -> h0_t @ whh0 (layer-0 recurrent term for step t+1);
    #        the zero block removes the h1 contribution.
    w_big = jnp.concatenate(
        [w1,
         jnp.concatenate([whh0, jnp.zeros((H, 4 * H), jnp.float32)], axis=0)],
        axis=1)                                                        # (2H, 8H)

    fcw = fc_w.T                                                       # (H, 3)
    fcb = fc_b[None, :]                                                # (1, 3)
    return wih0, b0, w_big, b1, fcw, fcb


def net_forward(x, kparams):
    """Equivalent of Net.forward(x): x is any shape viewable as (-1, 40)."""
    x = x.reshape(-1, T).astype(jnp.float32)
    B = x.shape[0]
    # time-major flattened input: row t*B + b holds x[b, t]
    x_flat = jnp.transpose(x, (1, 0)).reshape(T * B, 1)

    wih0, b0, w_big, b1, fcw, fcb = kparams
    vmem = pl.BlockSpec(memory_space=pltpu.MemorySpace.VMEM)

    out = pl.pallas_call(
        net_kernel,
        out_shape=jax.ShapeDtypeStruct((B, NCLASS), jnp.float32),
        in_specs=[vmem] * 7,
        out_specs=vmem,
    )(x_flat, wih0, b0, w_big, b1, fcw, fcb)
    return out


def net_reference(x, torch_params):
    """Pure-JAX, PyTorch-faithful reference (standard [i,f,g,o] gate order)."""
    x = x.reshape(-1, T).astype(jnp.float32)
    (w_ih_l0, w_hh_l0, b_ih_l0, b_hh_l0,
     w_ih_l1, w_hh_l1, b_ih_l1, b_hh_l1, fc_w, fc_b) = torch_params
    B = x.shape[0]

    def cell(gates, c):
        i = jax.nn.sigmoid(gates[:, :H])
        f = jax.nn.sigmoid(gates[:, H:2 * H])
        g = jnp.tanh(gates[:, 2 * H:3 * H])
        o = jax.nn.sigmoid(gates[:, 3 * H:])
        c = f * c + i * g
        return o * jnp.tanh(c), c

    h0 = c0 = h1 = c1 = jnp.zeros((B, H), jnp.float32)
    for t in range(T):
        xt = x[:, t:t + 1]
        g0 = xt @ w_ih_l0.T + h0 @ w_hh_l0.T + b_ih_l0 + b_hh_l0
        h0, c0 = cell(g0, c0)
        g1 = h0 @ w_ih_l1.T + h1 @ w_hh_l1.T + b_ih_l1 + b_hh_l1
        h1, c1 = cell(g1, c1)
    h = jnp.maximum(h1, 0.0)
    logits = h @ fc_w.T + fc_b
    return jax.nn.softmax(logits, axis=1)


if __name__ == "__main__":
    key = jax.random.PRNGKey(0)
    pkey, xkey = jax.random.split(key)
    torch_params = init_params(pkey)
    kparams = pack_params(torch_params)

    # Small batch: 8 sequences of length 40 (input feature dim 1).
    x = jax.random.normal(xkey, (8, 40), jnp.float32)

    out = net_forward(x, kparams)
    out = jax.block_until_ready(out)

    ref = net_reference(x, torch_params)
    assert out.shape == (8, NCLASS)
    assert jnp.allclose(jnp.sum(out, axis=1), 1.0, atol=1e-5)
    assert jnp.allclose(out, ref, atol=1e-5, rtol=1e-5)

    print("KERNEL_OK")
</pallas_src>

<mosaic_0001>
module attributes {stable_mosaic.version = 11 : i64} {
  func.func @net_kernel(%arg0: memref<320x1xf32, #tpu.memory_space<vmem>>, %arg1: memref<1x256xf32, #tpu.memory_space<vmem>>, %arg2: memref<1x256xf32, #tpu.memory_space<vmem>>, %arg3: memref<128x512xf32, #tpu.memory_space<vmem>>, %arg4: memref<1x256xf32, #tpu.memory_space<vmem>>, %arg5: memref<64x3xf32, #tpu.memory_space<vmem>>, %arg6: memref<1x3xf32, #tpu.memory_space<vmem>>, %arg7: memref<8x3xf32, #tpu.memory_space<vmem>>) attributes {dimension_semantics = [], scalar_prefetch = 0 : i64, scratch_operands = 0 : i64, tpu.core_type = #tpu.core_type<tc>} {
    %cst = arith.constant 0.000000e+00 : f32
    %0 = vector.broadcast %cst : f32 to vector<8x64xf32>
    %cst_0 = arith.constant 0.000000e+00 : f32
    %1 = vector.broadcast %cst_0 : f32 to vector<8x256xf32>
    %c0_i32 = arith.constant 0 : i32
    %c10_i32 = arith.constant 10 : i32
    %2 = arith.addi %c0_i32, %c10_i32 : i32
    %c1_i32 = arith.constant 1 : i32
    %3:4 = scf.for %arg8 = %c0_i32 to %2 step %c1_i32 iter_args(%arg9 = %1, %arg10 = %0, %arg11 = %0, %arg12 = %0) -> (vector<8x256xf32>, vector<8x64xf32>, vector<8x64xf32>, vector<8x64xf32>)  : i32 {
      %c32_i32 = arith.constant 32 : i32
      %21 = arith.muli %arg8, %c32_i32 : i32
      %22 = tpu.assume_multiple %21, 32 : i32
      %23 = arith.index_cast %22 : i32 to index
      %c0_11 = arith.constant 0 : index
      %24 = vector.load %arg0[%23, %c0_11] : memref<320x1xf32, #tpu.memory_space<vmem>>, vector<32x1xf32>
      %c0_12 = arith.constant 0 : index
      %c0_13 = arith.constant 0 : index
      %25 = vector.load %arg1[%c0_12, %c0_13] : memref<1x256xf32, #tpu.memory_space<vmem>>, vector<1x256xf32>
      %26 = vector.broadcast %24 : vector<32x1xf32> to vector<32x256xf32>
      %27 = vector.broadcast %25 : vector<1x256xf32> to vector<32x256xf32>
      %28 = arith.mulf %26, %27 : vector<32x256xf32>
      %c0_14 = arith.constant 0 : index
      %c0_15 = arith.constant 0 : index
      %29 = vector.load %arg2[%c0_14, %c0_15] : memref<1x256xf32, #tpu.memory_space<vmem>>, vector<1x256xf32>
      %30 = vector.broadcast %29 : vector<1x256xf32> to vector<32x256xf32>
      %31 = arith.addf %28, %30 : vector<32x256xf32>
      %32 = vector.extract_strided_slice %31 {offsets = [0, 0], sizes = [8, 256], strides = [1, 1]} : vector<32x256xf32> to vector<8x256xf32>
      %33 = arith.addf %32, %arg9 : vector<8x256xf32>
      %34 = math.tanh %33 : vector<8x256xf32>
      %35 = vector.extract_strided_slice %34 {offsets = [0, 0], sizes = [8, 192], strides = [1, 1]} : vector<8x256xf32> to vector<8x192xf32>
      %cst_16 = arith.constant 5.000000e-01 : f32
      %36 = vector.broadcast %cst_16 : f32 to vector<8x192xf32>
      %37 = arith.mulf %36, %35 : vector<8x192xf32>
      %cst_17 = arith.constant 5.000000e-01 : f32
      %38 = vector.broadcast %cst_17 : f32 to vector<8x192xf32>
      %39 = arith.addf %37, %38 : vector<8x192xf32>
      %40 = vector.extract_strided_slice %39 {offsets = [0, 0], sizes = [8, 64], strides = [1, 1]} : vector<8x192xf32> to vector<8x64xf32>
      %41 = vector.extract_strided_slice %39 {offsets = [0, 64], sizes = [8, 64], strides = [1, 1]} : vector<8x192xf32> to vector<8x64xf32>
      %42 = vector.extract_strided_slice %39 {offsets = [0, 128], sizes = [8, 64], strides = [1, 1]} : vector<8x192xf32> to vector<8x64xf32>
      %43 = vector.extract_strided_slice %34 {offsets = [0, 192], sizes = [8, 64], strides = [1, 1]} : vector<8x256xf32> to vector<8x64xf32>
      %44 = arith.mulf %41, %arg10 : vector<8x64xf32>
      %45 = arith.mulf %40, %43 : vector<8x64xf32>
      %46 = arith.addf %44, %45 : vector<8x64xf32>
      %47 = math.tanh %46 : vector<8x64xf32>
      %48 = arith.mulf %42, %47 : vector<8x64xf32>
      %49 = tpu.concatenate %48, %arg11 in 1 : vector<8x64xf32>, vector<8x64xf32> -> vector<8x128xf32>
      %c0_18 = arith.constant 0 : index
      %c0_19 = arith.constant 0 : index
      %50 = vector.load %arg3[%c0_18, %c0_19] : memref<128x512xf32, #tpu.memory_space<vmem>>, vector<128x512xf32>
      %cst_20 = arith.constant dense<0.000000e+00> : vector<8x512xf32>
      %51 = tpu.matmul %49, %50, %cst_20 {dimension_numbers = #tpu.dot_dimension_numbers<[1], [0], [0], [1], [0, 0, 1, 1], [], []>} : vector<8x128xf32>, vector<128x512xf32>, vector<8x512xf32> -> vector<8x512xf32>
      %52 = vector.extract_strided_slice %51 {offsets = [0, 0], sizes = [8, 256], strides = [1, 1]} : vector<8x512xf32> to vector<8x256xf32>
      %c0_21 = arith.constant 0 : index
      %c0_22 = arith.constant 0 : index
      %53 = vector.load %arg4[%c0_21, %c0_22] : memref<1x256xf32, #tpu.memory_space<vmem>>, vector<1x256xf32>
      %54 = vector.broadcast %53 : vector<1x256xf32> to vector<8x256xf32>
      %55 = arith.addf %52, %54 : vector<8x256xf32>
      %56 = math.tanh %55 : vector<8x256xf32>
      %57 = vector.extract_strided_slice %56 {offsets = [0, 0], sizes = [8, 192], strides = [1, 1]} : vector<8x256xf32> to vector<8x192xf32>
      %cst_23 = arith.constant 5.000000e-01 : f32
      %58 = vector.broadcast %cst_23 : f32 to vector<8x192xf32>
      %59 = arith.mulf %58, %57 : vector<8x192xf32>
      %cst_24 = arith.constant 5.000000e-01 : f32
      %60 = vector.broadcast %cst_24 : f32 to vector<8x192xf32>
      %61 = arith.addf %59, %60 : vector<8x192xf32>
      %62 = vector.extract_strided_slice %61 {offsets = [0, 0], sizes = [8, 64], strides = [1, 1]} : vector<8x192xf32> to vector<8x64xf32>
      %63 = vector.extract_strided_slice %61 {offsets = [0, 64], sizes = [8, 64], strides = [1, 1]} : vector<8x192xf32> to vector<8x64xf32>
      %64 = vector.extract_strided_slice %61 {offsets = [0, 128], sizes = [8, 64], strides = [1, 1]} : vector<8x192xf32> to vector<8x64xf32>
      %65 = vector.extract_strided_slice %56 {offsets = [0, 192], sizes = [8, 64], strides = [1, 1]} : vector<8x256xf32> to vector<8x64xf32>
      %66 = arith.mulf %63, %arg12 : vector<8x64xf32>
      %67 = arith.mulf %62, %65 : vector<8x64xf32>
      %68 = arith.addf %66, %67 : vector<8x64xf32>
      %69 = math.tanh %68 : vector<8x64xf32>
      %70 = arith.mulf %64, %69 : vector<8x64xf32>
      %71 = vector.extract_strided_slice %51 {offsets = [0, 256], sizes = [8, 256], strides = [1, 1]} : vector<8x512xf32> to vector<8x256xf32>
      %72 = vector.extract_strided_slice %31 {offsets = [8, 0], sizes = [8, 256], strides = [1, 1]} : vector<32x256xf32> to vector<8x256xf32>
      %73 = arith.addf %72, %71 : vector<8x256xf32>
      %74 = math.tanh %73 : vector<8x256xf32>
      %75 = vector.extract_strided_slice %74 {offsets = [0, 0], sizes = [8, 192], strides = [1, 1]} : vector<8x256xf32> to vector<8x192xf32>
      %cst_25 = arith.constant 5.000000e-01 : f32
      %76 = vector.broadcast %cst_25 : f32 to vector<8x192xf32>
      %77 = arith.mulf %76, %75 : vector<8x192xf32>
      %cst_26 = arith.constant 5.000000e-01 : f32
      %78 = vector.broadcast %cst_26 : f32 to vector<8x192xf32>
      %79 = arith.addf %77, %78 : vector<8x192xf32>
      %80 = vector.extract_strided_slice %79 {offsets = [0, 0], sizes = [8, 64], strides = [1, 1]} : vector<8x192xf32> to vector<8x64xf32>
      %81 = vector.extract_strided_slice %79 {offsets = [0, 64], sizes = [8, 64], strides = [1, 1]} : vector<8x192xf32> to vector<8x64xf32>
      %82 = vector.extract_strided_slice %79 {offsets = [0, 128], sizes = [8, 64], strides = [1, 1]} : vector<8x192xf32> to vector<8x64xf32>
      %83 = vector.extract_strided_slice %74 {offsets = [0, 192], sizes = [8, 64], strides = [1, 1]} : vector<8x256xf32> to vector<8x64xf32>
      %84 = arith.mulf %81, %46 : vector<8x64xf32>
      %85 = arith.mulf %80, %83 : vector<8x64xf32>
      %86 = arith.addf %84, %85 : vector<8x64xf32>
      %87 = math.tanh %86 : vector<8x64xf32>
      %88 = arith.mulf %82, %87 : vector<8x64xf32>
      %89 = tpu.concatenate %88, %70 in 1 : vector<8x64xf32>, vector<8x64xf32> -> vector<8x128xf32>
      %c0_27 = arith.constant 0 : index
      %c0_28 = arith.constant 0 : index
      %90 = vector.load %arg3[%c0_27, %c0_28] : memref<128x512xf32, #tpu.memory_space<vmem>>, vector<128x512xf32>
      %cst_29 = arith.constant dense<0.000000e+00> : vector<8x512xf32>
      %91 = tpu.matmul %89, %90, %cst_29 {dimension_numbers = #tpu.dot_dimension_numbers<[1], [0], [0], [1], [0, 0, 1, 1], [], []>} : vector<8x128xf32>, vector<128x512xf32>, vector<8x512xf32> -> vector<8x512xf32>
      %92 = vector.extract_strided_slice %91 {offsets = [0, 0], sizes = [8, 256], strides = [1, 1]} : vector<8x512xf32> to vector<8x256xf32>
      %c0_30 = arith.constant 0 : index
      %c0_31 = arith.constant 0 : index
      %93 = vector.load %arg4[%c0_30, %c0_31] : memref<1x256xf32, #tpu.memory_space<vmem>>, vector<1x256xf32>
      %94 = vector.broadcast %93 : vector<1x256xf32> to vector<8x256xf32>
      %95 = arith.addf %92, %94 : vector<8x256xf32>
      %96 = math.tanh %95 : vector<8x256xf32>
      %97 = vector.extract_strided_slice %96 {offsets = [0, 0], sizes = [8, 192], strides = [1, 1]} : vector<8x256xf32> to vector<8x192xf32>
      %cst_32 = arith.constant 5.000000e-01 : f32
      %98 = vector.broadcast %cst_32 : f32 to vector<8x192xf32>
      %99 = arith.mulf %98, %97 : vector<8x192xf32>
      %cst_33 = arith.constant 5.000000e-01 : f32
      %100 = vector.broadcast %cst_33 : f32 to vector<8x192xf32>
      %101 = arith.addf %99, %100 : vector<8x192xf32>
      %102 = vector.extract_strided_slice %101 {offsets = [0, 0], sizes = [8, 64], strides = [1, 1]} : vector<8x192xf32> to vector<8x64xf32>
      %103 = vector.extract_strided_slice %101 {offsets = [0, 64], sizes = [8, 64], strides = [1, 1]} : vector<8x192xf32> to vector<8x64xf32>
      %104 = vector.extract_strided_slice %101 {offsets = [0, 128], sizes = [8, 64], strides = [1, 1]} : vector<8x192xf32> to vector<8x64xf32>
      %105 = vector.extract_strided_slice %96 {offsets = [0, 192], sizes = [8, 64], strides = [1, 1]} : vector<8x256xf32> to vector<8x64xf32>
      %106 = arith.mulf %103, %68 : vector<8x64xf32>
      %107 = arith.mulf %102, %105 : vector<8x64xf32>
      %108 = arith.addf %106, %107 : vector<8x64xf32>
      %109 = math.tanh %108 : vector<8x64xf32>
      %110 = arith.mulf %104, %109 : vector<8x64xf32>
      %111 = vector.extract_strided_slice %91 {offsets = [0, 256], sizes = [8, 256], strides = [1, 1]} : vector<8x512xf32> to vector<8x256xf32>
      %112 = vector.extract_strided_slice %31 {offsets = [16, 0], sizes = [8, 256], strides = [1, 1]} : vector<32x256xf32> to vector<8x256xf32>
      %113 = arith.addf %112, %111 : vector<8x256xf32>
      %114 = math.tanh %113 : vector<8x256xf32>
      %115 = vector.extract_strided_slice %114 {offsets = [0, 0], sizes = [8, 192], strides = [1, 1]} : vector<8x256xf32> to vector<8x192xf32>
      %cst_34 = arith.constant 5.000000e-01 : f32
      %116 = vector.broadcast %cst_34 : f32 to vector<8x192xf32>
      %117 = arith.mulf %116, %115 : vector<8x192xf32>
      %cst_35 = arith.constant 5.000000e-01 : f32
      %118 = vector.broadcast %cst_35 : f32 to vector<8x192xf32>
      %119 = arith.addf %117, %118 : vector<8x192xf32>
      %120 = vector.extract_strided_slice %119 {offsets = [0, 0], sizes = [8, 64], strides = [1, 1]} : vector<8x192xf32> to vector<8x64xf32>
      %121 = vector.extract_strided_slice %119 {offsets = [0, 64], sizes = [8, 64], strides = [1, 1]} : vector<8x192xf32> to vector<8x64xf32>
      %122 = vector.extract_strided_slice %119 {offsets = [0, 128], sizes = [8, 64], strides = [1, 1]} : vector<8x192xf32> to vector<8x64xf32>
      %123 = vector.extract_strided_slice %114 {offsets = [0, 192], sizes = [8, 64], strides = [1, 1]} : vector<8x256xf32> to vector<8x64xf32>
      %124 = arith.mulf %121, %86 : vector<8x64xf32>
      %125 = arith.mulf %120, %123 : vector<8x64xf32>
      %126 = arith.addf %124, %125 : vector<8x64xf32>
      %127 = math.tanh %126 : vector<8x64xf32>
      %128 = arith.mulf %122, %127 : vector<8x64xf32>
      %129 = tpu.concatenate %128, %110 in 1 : vector<8x64xf32>, vector<8x64xf32> -> vector<8x128xf32>
      %c0_36 = arith.constant 0 : index
      %c0_37 = arith.constant 0 : index
      %130 = vector.load %arg3[%c0_36, %c0_37] : memref<128x512xf32, #tpu.memory_space<vmem>>, vector<128x512xf32>
      %cst_38 = arith.constant dense<0.000000e+00> : vector<8x512xf32>
      %131 = tpu.matmul %129, %130, %cst_38 {dimension_numbers = #tpu.dot_dimension_numbers<[1], [0], [0], [1], [0, 0, 1, 1], [], []>} : vector<8x128xf32>, vector<128x512xf32>, vector<8x512xf32> -> vector<8x512xf32>
      %132 = vector.extract_strided_slice %131 {offsets = [0, 0], sizes = [8, 256], strides = [1, 1]} : vector<8x512xf32> to vector<8x256xf32>
      %c0_39 = arith.constant 0 : index
      %c0_40 = arith.constant 0 : index
      %133 = vector.load %arg4[%c0_39, %c0_40] : memref<1x256xf32, #tpu.memory_space<vmem>>, vector<1x256xf32>
      %134 = vector.broadcast %133 : vector<1x256xf32> to vector<8x256xf32>
      %135 = arith.addf %132, %134 : vector<8x256xf32>
      %136 = math.tanh %135 : vector<8x256xf32>
      %137 = vector.extract_strided_slice %136 {offsets = [0, 0], sizes = [8, 192], strides = [1, 1]} : vector<8x256xf32> to vector<8x192xf32>
      %cst_41 = arith.constant 5.000000e-01 : f32
      %138 = vector.broadcast %cst_41 : f32 to vector<8x192xf32>
      %139 = arith.mulf %138, %137 : vector<8x192xf32>
      %cst_42 = arith.constant 5.000000e-01 : f32
      %140 = vector.broadcast %cst_42 : f32 to vector<8x192xf32>
      %141 = arith.addf %139, %140 : vector<8x192xf32>
      %142 = vector.extract_strided_slice %141 {offsets = [0, 0], sizes = [8, 64], strides = [1, 1]} : vector<8x192xf32> to vector<8x64xf32>
      %143 = vector.extract_strided_slice %141 {offsets = [0, 64], sizes = [8, 64], strides = [1, 1]} : vector<8x192xf32> to vector<8x64xf32>
      %144 = vector.extract_strided_slice %141 {offsets = [0, 128], sizes = [8, 64], strides = [1, 1]} : vector<8x192xf32> to vector<8x64xf32>
      %145 = vector.extract_strided_slice %136 {offsets = [0, 192], sizes = [8, 64], strides = [1, 1]} : vector<8x256xf32> to vector<8x64xf32>
      %146 = arith.mulf %143, %108 : vector<8x64xf32>
      %147 = arith.mulf %142, %145 : vector<8x64xf32>
      %148 = arith.addf %146, %147 : vector<8x64xf32>
      %149 = math.tanh %148 : vector<8x64xf32>
      %150 = arith.mulf %144, %149 : vector<8x64xf32>
      %151 = vector.extract_strided_slice %131 {offsets = [0, 256], sizes = [8, 256], strides = [1, 1]} : vector<8x512xf32> to vector<8x256xf32>
      %152 = vector.extract_strided_slice %31 {offsets = [24, 0], sizes = [8, 256], strides = [1, 1]} : vector<32x256xf32> to vector<8x256xf32>
      %153 = arith.addf %152, %151 : vector<8x256xf32>
      %154 = math.tanh %153 : vector<8x256xf32>
      %155 = vector.extract_strided_slice %154 {offsets = [0, 0], sizes = [8, 192], strides = [1, 1]} : vector<8x256xf32> to vector<8x192xf32>
      %cst_43 = arith.constant 5.000000e-01 : f32
      %156 = vector.broadcast %cst_43 : f32 to vector<8x192xf32>
      %157 = arith.mulf %156, %155 : vector<8x192xf32>
      %cst_44 = arith.constant 5.000000e-01 : f32
      %158 = vector.broadcast %cst_44 : f32 to vector<8x192xf32>
      %159 = arith.addf %157, %158 : vector<8x192xf32>
      %160 = vector.extract_strided_slice %159 {offsets = [0, 0], sizes = [8, 64], strides = [1, 1]} : vector<8x192xf32> to vector<8x64xf32>
      %161 = vector.extract_strided_slice %159 {offsets = [0, 64], sizes = [8, 64], strides = [1, 1]} : vector<8x192xf32> to vector<8x64xf32>
      %162 = vector.extract_strided_slice %159 {offsets = [0, 128], sizes = [8, 64], strides = [1, 1]} : vector<8x192xf32> to vector<8x64xf32>
      %163 = vector.extract_strided_slice %154 {offsets = [0, 192], sizes = [8, 64], strides = [1, 1]} : vector<8x256xf32> to vector<8x64xf32>
      %164 = arith.mulf %161, %126 : vector<8x64xf32>
      %165 = arith.mulf %160, %163 : vector<8x64xf32>
      %166 = arith.addf %164, %165 : vector<8x64xf32>
      %167 = math.tanh %166 : vector<8x64xf32>
      %168 = arith.mulf %162, %167 : vector<8x64xf32>
      %169 = tpu.concatenate %168, %150 in 1 : vector<8x64xf32>, vector<8x64xf32> -> vector<8x128xf32>
      %c0_45 = arith.constant 0 : index
      %c0_46 = arith.constant 0 : index
      %170 = vector.load %arg3[%c0_45, %c0_46] : memref<128x512xf32, #tpu.memory_space<vmem>>, vector<128x512xf32>
      %cst_47 = arith.constant dense<0.000000e+00> : vector<8x512xf32>
      %171 = tpu.matmul %169, %170, %cst_47 {dimension_numbers = #tpu.dot_dimension_numbers<[1], [0], [0], [1], [0, 0, 1, 1], [], []>} : vector<8x128xf32>, vector<128x512xf32>, vector<8x512xf32> -> vector<8x512xf32>
      %172 = vector.extract_strided_slice %171 {offsets = [0, 0], sizes = [8, 256], strides = [1, 1]} : vector<8x512xf32> to vector<8x256xf32>
      %c0_48 = arith.constant 0 : index
      %c0_49 = arith.constant 0 : index
      %173 = vector.load %arg4[%c0_48, %c0_49] : memref<1x256xf32, #tpu.memory_space<vmem>>, vector<1x256xf32>
      %174 = vector.broadcast %173 : vector<1x256xf32> to vector<8x256xf32>
      %175 = arith.addf %172, %174 : vector<8x256xf32>
      %176 = math.tanh %175 : vector<8x256xf32>
      %177 = vector.extract_strided_slice %176 {offsets = [0, 0], sizes = [8, 192], strides = [1, 1]} : vector<8x256xf32> to vector<8x192xf32>
      %cst_50 = arith.constant 5.000000e-01 : f32
      %178 = vector.broadcast %cst_50 : f32 to vector<8x192xf32>
      %179 = arith.mulf %178, %177 : vector<8x192xf32>
      %cst_51 = arith.constant 5.000000e-01 : f32
      %180 = vector.broadcast %cst_51 : f32 to vector<8x192xf32>
      %181 = arith.addf %179, %180 : vector<8x192xf32>
      %182 = vector.extract_strided_slice %181 {offsets = [0, 0], sizes = [8, 64], strides = [1, 1]} : vector<8x192xf32> to vector<8x64xf32>
      %183 = vector.extract_strided_slice %181 {offsets = [0, 64], sizes = [8, 64], strides = [1, 1]} : vector<8x192xf32> to vector<8x64xf32>
      %184 = vector.extract_strided_slice %181 {offsets = [0, 128], sizes = [8, 64], strides = [1, 1]} : vector<8x192xf32> to vector<8x64xf32>
      %185 = vector.extract_strided_slice %176 {offsets = [0, 192], sizes = [8, 64], strides = [1, 1]} : vector<8x256xf32> to vector<8x64xf32>
      %186 = arith.mulf %183, %148 : vector<8x64xf32>
      %187 = arith.mulf %182, %185 : vector<8x64xf32>
      %188 = arith.addf %186, %187 : vector<8x64xf32>
      %189 = math.tanh %188 : vector<8x64xf32>
      %190 = arith.mulf %184, %189 : vector<8x64xf32>
      %191 = vector.extract_strided_slice %171 {offsets = [0, 256], sizes = [8, 256], strides = [1, 1]} : vector<8x512xf32> to vector<8x256xf32>
      scf.yield %191, %166, %190, %188 : vector<8x256xf32>, vector<8x64xf32>, vector<8x64xf32>, vector<8x64xf32>
    }
    %c10_i32_1 = arith.constant 10 : i32
    %cst_2 = arith.constant 0.000000e+00 : f32
    %4 = vector.broadcast %cst_2 : f32 to vector<8x64xf32>
    %5 = arith.maximumf %3#2, %4 : vector<8x64xf32>
    %c0 = arith.constant 0 : index
    %c0_3 = arith.constant 0 : index
    %6 = vector.load %arg5[%c0, %c0_3] : memref<64x3xf32, #tpu.memory_space<vmem>>, vector<64x3xf32>
    %cst_4 = arith.constant dense<0.000000e+00> : vector<8x3xf32>
    %7 = tpu.matmul %5, %6, %cst_4 {dimension_numbers = #tpu.dot_dimension_numbers<[1], [0], [0], [1], [0, 0, 1, 1], [], []>} : vector<8x64xf32>, vector<64x3xf32>, vector<8x3xf32> -> vector<8x3xf32>
    %c0_5 = arith.constant 0 : index
    %c0_6 = arith.constant 0 : index
    %8 = vector.load %arg6[%c0_5, %c0_6] : memref<1x3xf32, #tpu.memory_space<vmem>>, vector<1x3xf32>
    %9 = vector.broadcast %8 : vector<1x3xf32> to vector<8x3xf32>
    %10 = arith.addf %7, %9 : vector<8x3xf32>
    %cst_7 = arith.constant dense<0xFF800000> : vector<8xf32>
    %11 = vector.multi_reduction <maximumf>, %10, %cst_7 [1] : vector<8x3xf32> to vector<8xf32>
    %12 = vector.shape_cast %11 : vector<8xf32> to vector<8x1xf32>
    %13 = vector.broadcast %12 : vector<8x1xf32> to vector<8x3xf32>
    %14 = arith.subf %10, %13 : vector<8x3xf32>
    %15 = math.exp %14 : vector<8x3xf32>
    %cst_8 = arith.constant dense<0.000000e+00> : vector<8xf32>
    %16 = vector.multi_reduction <add>, %15, %cst_8 [1] : vector<8x3xf32> to vector<8xf32>
    %17 = vector.shape_cast %16 : vector<8xf32> to vector<8x1xf32>
    %18 = vector.broadcast %17 : vector<8x1xf32> to vector<8x3xf32>
    %19 = arith.divf %15, %18 : vector<8x3xf32>
    %c0_9 = arith.constant 0 : index
    %c0_10 = arith.constant 0 : index
    %20 = vector.load %arg7[%c0_9, %c0_10] : memref<8x3xf32, #tpu.memory_space<vmem>>, vector<8x3xf32>
    tpu.vector_store %arg7[%c0_9, %c0_10], %19 {strides = array<i32>} : memref<8x3xf32, #tpu.memory_space<vmem>>, vector<8x3xf32>,
    return
  }
}

</mosaic_0001>

<llo_original>
// kernel: tpu_custom_call.1
$region0: #{tpu_custom_call.1}
  #allocation0 [shape = 'u32[]', space=smem, size = 0x4, offset = 0x4, fixed_abs, tag = 'smem constant byte address 0x4 - core index']
  #allocation1 [shape = 'u32[144,128]{1,0:T(1,128)}', space=vmem, size = 0x12000, scoped, tag = 'internal scratch']
  %s0 = inlined_call_operand.vmem [shape: f32[320,1], index: 0, kind: input, shape index: {}]
  %s1 = inlined_call_operand.vmem [shape: f32[1,256], index: 1, kind: input, shape index: {}]
  %s2 = inlined_call_operand.vmem [shape: f32[1,256], index: 2, kind: input, shape index: {}]
  %s3 = inlined_call_operand.hbm [shape: f32[128,512], index: 3, kind: input, shape index: {}]
  %s4 = inlined_call_operand.vmem [shape: f32[1,256], index: 4, kind: input, shape index: {}]
  %s5 = inlined_call_operand.vmem [shape: f32[64,3], index: 5, kind: input, shape index: {}]
  %s6 = inlined_call_operand.vmem [shape: f32[1,3], index: 6, kind: input, shape index: {}]
  %s7 = inlined_call_operand.vmem [shape: f32[8,3], index: 7, kind: output, shape index: {}]
  %s8 = sld [smem:[#allocation0]]
  $region49: #{tpu_custom_call.1} parent=0
    _
  %s10 = ssub.s32 1, %s8
  %s11 = scalar_select 0, %s10, %s8
  $region1: #{tpu_custom_call.1} parent=0
    #allocation2 [shape = 'u8[262144]{0}', space=vmem, size = 0x40000, scoped, tag = 'input window, operand 3, single buffered']
    #allocation3 [shape = 's32[1]{0}', space=sflag, size = 0x4, scoped, tag = 'scoped memory for tpu_custom_call.1']
    %12 = vsyncpa [#allocation3], 0
    // Predicated region
    $region2: #{tpu_custom_call.1} parent=1 // pred_check
      _
    $region3: #{tpu_custom_call.1} parent=1 // pred_check_branch
      %14 = sbr.rel (0) target = $region5
    $region4: #{tpu_custom_call.1} parent=1 // pred_region
      _
    $region5: #{tpu_custom_call.1} parent=1 // pred_fallthru
      _
    // Predicated region
    $region6: #{tpu_custom_call.1} parent=1 // pred_check
      _
    $region7: #{tpu_custom_call.1} parent=1 // pred_check_branch
      %16 = sbr.rel (0) target = $region9
    $region8: #{tpu_custom_call.1} parent=1 // pred_region
      _
    $region9: #{tpu_custom_call.1} parent=1 // pred_fallthru
      _
    // Predicated region
    $region10: #{tpu_custom_call.1} parent=1 // pred_check
      _
    $region11: #{tpu_custom_call.1} parent=1 // pred_check_branch
      %18 = sbr.rel (0) target = $region13
    $region12: #{tpu_custom_call.1} parent=1 // pred_region
      _
    $region13: #{tpu_custom_call.1} parent=1 // pred_fallthru
      _
    // Predicated region
    $region14: #{tpu_custom_call.1} parent=1 // pred_check
      _
    $region15: #{tpu_custom_call.1} parent=1 // pred_check_branch
      %20 = sbr.rel (0) target = $region17
    $region16: #{tpu_custom_call.1} parent=1 // pred_region
      %s22 = ssub.s32 8192, 8192
      %23 = vsyncadd [#allocation3], %s22
      %s24 = sshll.u32 [#allocation2], 4
      %s25 = int_to_ptr.vmem [resolvable:$true] %s24
      %30 = dma.hbm_to_vmem [thread:$0]  %s3, 8192, %s25, [#allocation3], 512, 512, 32
    $region17: #{tpu_custom_call.1} parent=1 // pred_fallthru
      _
    // Predicated region
    $region18: #{tpu_custom_call.1} parent=1 // pred_check
      _
    $region19: #{tpu_custom_call.1} parent=1 // pred_check_branch
      %32 = sbr.rel (0) target = $region21
    $region20: #{tpu_custom_call.1} parent=1 // pred_region
      _
    $region21: #{tpu_custom_call.1} parent=1 // pred_fallthru
      _
    // Predicated region
    $region22: #{tpu_custom_call.1} parent=1 // pred_check
      _
    $region23: #{tpu_custom_call.1} parent=1 // pred_check_branch
      %34 = sbr.rel (0) target = $region25
    $region24: #{tpu_custom_call.1} parent=1 // pred_region
      _
    $region25: #{tpu_custom_call.1} parent=1 // pred_fallthru
      _
    // Predicated region
    $region26: #{tpu_custom_call.1} parent=1 // pred_check
      _
    $region27: #{tpu_custom_call.1} parent=1 // pred_check_branch
      %36 = sbr.rel (0) target = $region29
    $region28: #{tpu_custom_call.1} parent=1 // pred_region
      _
    $region29: #{tpu_custom_call.1} parent=1 // pred_fallthru
      _
    // Predicated region
    $region30: #{tpu_custom_call.1} parent=1 // pred_check
      _
    $region31: #{tpu_custom_call.1} parent=1 // pred_check_branch
      %38 = sbr.rel (0) target = $region33
    $region32: #{tpu_custom_call.1} parent=1 // pred_region
      %39 = dma.done [#allocation3], 8192
    $region33: #{tpu_custom_call.1} parent=1 // pred_fallthru
      _
    loop: start=0, step=1, limit=10
    $region34: #{tpu_custom_call.1} parent=1 // loop_pre_header
      _
    $region35: #{tpu_custom_call.1} parent=1 // loop_header
      %s41 = sphi 0, %s45
      %p42 = scmp.ge.s32.totalorder %s41, 10
      %v46 = vphi 0.0, %v953
      %v47 = vphi 0.0, %v955
      %v48 = vphi 0.0, %v803
      %v49 = vphi 0.0, %v981
      %v50 = vphi 0.0, %v975
    $region36: #{tpu_custom_call.1} parent=1 // loop_header_branch
      %44 = sbr.rel (%p42) target = $region40
    $region37: #{tpu_custom_call.1} parent=1 // loop_body
      %s51 = smul.u32 %s41, 32
      %s52 = scalar_lea.vmem %s0, %s51
      %v53 = vld [vmem:[%s52] sm:$0xff]
      %v54 = vld [vmem:[%s52 + $0x8] sm:$0xff]
      %v55 = vld [vmem:[%s52 + $0x10] sm:$0xff]
      %v56 = vld [vmem:[%s52 + $0x18] sm:$0xff]
      %v57 = vld [vmem:[%s1] sm:$0x3]
      %59 = vset.pattern.permute.xlu0 0
      %60 = vperm.xlu0 %59, %v53
      %v61 = vpop.permute.xlu0 %60
      %64 = vset.pattern.permute.xlu0 0
      %65 = vperm.xlu0 %64, %v54
      %v66 = vpop.permute.xlu0 %65
      %69 = vset.pattern.permute.xlu0 0
      %70 = vperm.xlu0 %69, %v55
      %v71 = vpop.permute.xlu0 %70
      %74 = vset.pattern.permute.xlu0 0
      %75 = vperm.xlu0 %74, %v56
      %v76 = vpop.permute.xlu0 %75
      %v79 = vlaneseq
      %v80 = vshrl.u32 %v79, 7
      %v81 = vsub.s32 0, %v80
      %v82 = vrot.slane %v57, %v81
      %v83 = vlaneseq
      %v84 = vshrl.u32 %v83, 7
      %v85 = vsub.s32 1, %v84
      %v86 = vrot.slane %v57, %v85
      %v89 = vmul.f32 %v61, %v82
      %v90 = vmul.f32 %v61, %v86
      %v91 = vmul.f32 %v66, %v82
      %v92 = vmul.f32 %v66, %v86
      %v93 = vmul.f32 %v71, %v82
      %v94 = vmul.f32 %v71, %v86
      %v95 = vmul.f32 %v76, %v82
      %v96 = vmul.f32 %v76, %v86
      %v97 = vld [vmem:[%s2] sm:$0x3]
      %v99 = vlaneseq
      %v100 = vshrl.u32 %v99, 7
      %v101 = vsub.s32 0, %v100
      %v102 = vrot.slane %v97, %v101
      %v103 = vlaneseq
      %v104 = vshrl.u32 %v103, 7
      %v105 = vsub.s32 1, %v104
      %v106 = vrot.slane %v97, %v105
      %v109 = vadd.f32 %v89, %v102
      %v110 = vadd.f32 %v90, %v106
      %v111 = vadd.f32 %v91, %v102
      %v112 = vadd.f32 %v92, %v106
      %v113 = vadd.f32 %v93, %v102
      %v114 = vadd.f32 %v94, %v106
      %v115 = vadd.f32 %v95, %v102
      %v116 = vadd.f32 %v96, %v106
      %v117 = vadd.f32 %v109, %v46
      %v118 = vadd.f32 %v110, %v47
      %v119 = vtanh.pop %v117
      %v120 = vtanh.pop %v118
      %v121 = vmul.f32 %v119, 0.5
      %v122 = vmul.f32 %v120, 0.5
      %v123 = vadd.f32 %v121, 0.5
      %v124 = vadd.f32 %v122, 0.5
      %v125 = vmul.f32 %v123, %v48
      %127 = vrot.lane.b32.xlu0 %v120, 64
      %v128 = vpop.permute.xlu0 %127
      %v130 = vmul.f32 %v123, %v128
      %132 = vrot.lane.b32.xlu0 %v130, 64
      %v133 = vpop.permute.xlu0 %132
      %v135 = vadd.f32 %v125, %v133
      %v136 = vtanh.pop %v135
      %138 = vrot.lane.b32.xlu0 %v136, 64
      %v139 = vpop.permute.xlu0 %138
      %v141 = vmul.f32 %v124, %v139
      %143 = vrot.lane.b32.xlu0 %v49, 64
      %v144 = vpop.permute.xlu0 %143
      %vm146 = vcmask 523264
      %v147 = vsel %vm146, %v141, %v144
      %v148 = vld [vmem:[#allocation2] sm:$0xff]
      %v149 = vld [vmem:[#allocation2 + $0x8] sm:$0xff]
      %v150 = vld [vmem:[#allocation2 + $0x10] sm:$0xff]
      %v151 = vld [vmem:[#allocation2 + $0x18] sm:$0xff]
      %v152 = vld [vmem:[#allocation2 + $0x20] sm:$0xff]
      %v153 = vld [vmem:[#allocation2 + $0x28] sm:$0xff]
      %v154 = vld [vmem:[#allocation2 + $0x30] sm:$0xff]
      %v155 = vld [vmem:[#allocation2 + $0x38] sm:$0xff]
      %v156 = vld [vmem:[#allocation2 + $0x40] sm:$0xff]
      %v157 = vld [vmem:[#allocation2 + $0x48] sm:$0xff]
      %v158 = vld [vmem:[#allocation2 + $0x50] sm:$0xff]
      %v159 = vld [vmem:[#allocation2 + $0x58] sm:$0xff]
      %v160 = vld [vmem:[#allocation2 + $0x60] sm:$0xff]
      %v161 = vld [vmem:[#allocation2 + $0x68] sm:$0xff]
      %v162 = vld [vmem:[#allocation2 + $0x70] sm:$0xff]
      %v163 = vld [vmem:[#allocation2 + $0x78] sm:$0xff]
      %v164 = vld [vmem:[#allocation2 + $0x80] sm:$0xff]
      %v165 = vld [vmem:[#allocation2 + $0x88] sm:$0xff]
      %v166 = vld [vmem:[#allocation2 + $0x90] sm:$0xff]
      %v167 = vld [vmem:[#allocation2 + $0x98] sm:$0xff]
      %v168 = vld [vmem:[#allocation2 + $0xa0] sm:$0xff]
      %v169 = vld [vmem:[#allocation2 + $0xa8] sm:$0xff]
      %v170 = vld [vmem:[#allocation2 + $0xb0] sm:$0xff]
      %v171 = vld [vmem:[#allocation2 + $0xb8] sm:$0xff]
      %v172 = vld [vmem:[#allocation2 + $0xc0] sm:$0xff]
      %v173 = vld [vmem:[#allocation2 + $0xc8] sm:$0xff]
      %v174 = vld [vmem:[#allocation2 + $0xd0] sm:$0xff]
      %v175 = vld [vmem:[#allocation2 + $0xd8] sm:$0xff]
      %v176 = vld [vmem:[#allocation2 + $0xe0] sm:$0xff]
      %v177 = vld [vmem:[#allocation2 + $0xe8] sm:$0xff]
      %v178 = vld [vmem:[#allocation2 + $0xf0] sm:$0xff]
      %v179 = vld [vmem:[#allocation2 + $0xf8] sm:$0xff]
      %v180 = vld [vmem:[#allocation2 + $0x100] sm:$0xff]
      %v181 = vld [vmem:[#allocation2 + $0x108] sm:$0xff]
      %v182 = vld [vmem:[#allocation2 + $0x110] sm:$0xff]
      %v183 = vld [vmem:[#allocation2 + $0x118] sm:$0xff]
      %v184 = vld [vmem:[#allocation2 + $0x120] sm:$0xff]
      %v185 = vld [vmem:[#allocation2 + $0x128] sm:$0xff]
      %v186 = vld [vmem:[#allocation2 + $0x130] sm:$0xff]
      %v187 = vld [vmem:[#allocation2 + $0x138] sm:$0xff]
      %v188 = vld [vmem:[#allocation2 + $0x140] sm:$0xff]
      %v189 = vld [vmem:[#allocation2 + $0x148] sm:$0xff]
      %v190 = vld [vmem:[#allocation2 + $0x150] sm:$0xff]
      %v191 = vld [vmem:[#allocation2 + $0x158] sm:$0xff]
      %v192 = vld [vmem:[#allocation2 + $0x160] sm:$0xff]
      %v193 = vld [vmem:[#allocation2 + $0x168] sm:$0xff]
      %v194 = vld [vmem:[#allocation2 + $0x170] sm:$0xff]
      %v195 = vld [vmem:[#allocation2 + $0x178] sm:$0xff]
      %v196 = vld [vmem:[#allocation2 + $0x180] sm:$0xff]
      %v197 = vld [vmem:[#allocation2 + $0x188] sm:$0xff]
      %v198 = vld [vmem:[#allocation2 + $0x190] sm:$0xff]
      %v199 = vld [vmem:[#allocation2 + $0x198] sm:$0xff]
      %v200 = vld [vmem:[#allocation2 + $0x1a0] sm:$0xff]
      %v201 = vld [vmem:[#allocation2 + $0x1a8] sm:$0xff]
      %v202 = vld [vmem:[#allocation2 + $0x1b0] sm:$0xff]
      %v203 = vld [vmem:[#allocation2 + $0x1b8] sm:$0xff]
      %v204 = vld [vmem:[#allocation2 + $0x1c0] sm:$0xff]
      %v205 = vld [vmem:[#allocation2 + $0x1c8] sm:$0xff]
      %v206 = vld [vmem:[#allocation2 + $0x1d0] sm:$0xff]
      %v207 = vld [vmem:[#allocation2 + $0x1d8] sm:$0xff]
      %v208 = vld [vmem:[#allocation2 + $0x1e0] sm:$0xff]
      %v209 = vld [vmem:[#allocation2 + $0x1e8] sm:$0xff]
      %v210 = vld [vmem:[#allocation2 + $0x1f0] sm:$0xff]
      %v211 = vld [vmem:[#allocation2 + $0x1f8] sm:$0xff]
      %212 = vmatprep.subr.mxu0 %v209
      %213 = vmatpush1.msra.mxu0 %v208
      %214 = vmatprep.subr.mxu0 %v205
      %215 = vmatpush1.msra.mxu0 %v204
      %216 = vmatprep.subr.mxu0 %v201
      %217 = vmatpush1.msra.mxu0 %v200
      %218 = vmatprep.subr.mxu0 %v197
      %219 = vmatpush1.msra.mxu0 %v196
      %220 = vmatprep.subr.mxu0 %v193
      %221 = vmatpush1.msra.mxu0 %v192
      %222 = vmatprep.subr.mxu0 %v189
      %223 = vmatpush1.msra.mxu0 %v188
      %224 = vmatprep.subr.mxu0 %v185
      %225 = vmatpush1.msra.mxu0 %v184
      %226 = vmatprep.subr.mxu0 %v181
      %227 = vmatpush1.msra.mxu0 %v180
      %228 = vmatprep.subr.mxu0 %v177
      %229 = vmatpush1.msra.mxu0 %v176
      %230 = vmatprep.subr.mxu0 %v173
      %231 = vmatpush1.msra.mxu0 %v172
      %232 = vmatprep.subr.mxu0 %v169
      %233 = vmatpush1.msra.mxu0 %v168
      %234 = vmatprep.subr.mxu0 %v165
      %235 = vmatpush1.msra.mxu0 %v164
      %236 = vmatprep.subr.mxu0 %v161
      %237 = vmatpush1.msra.mxu0 %v160
      %238 = vmatprep.subr.mxu0 %v157
      %239 = vmatpush1.msra.mxu0 %v156
      %240 = vmatprep.subr.mxu0 %v153
      %241 = vmatpush1.msra.mxu0 %v152
      %242 = vmatprep.subr.mxu0 %v149
      %243 = vmatpush1.msra.mxu0 %v148
      %244 = vmatprep.subr.mxu0 0.0
      %245 = vmatpush2.msra.mxu0 0.0
      %246 = vmatprep.subr.mxu0 0.0
      %247 = vmatpush2.msra.mxu0 0.0
      %248 = vmatprep.subr.mxu0 0.0
      %249 = vmatpush2.msra.mxu0 0.0
      %250 = vmatprep.subr.mxu0 0.0
      %251 = vmatpush2.msra.mxu0 0.0
      %252 = vmatprep.subr.mxu0 0.0
      %253 = vmatpush2.msra.mxu0 0.0
      %254 = vmatprep.subr.mxu0 0.0
      %255 = vmatpush2.msra.mxu0 0.0
      %256 = vmatprep.subr.mxu0 0.0
      %257 = vmatpush2.msra.mxu0 0.0
      %258 = vmatprep.subr.mxu0 0.0
      %259 = vmatpush2.msra.mxu0 0.0
      %260 = vmatprep.subr.mxu0 0.0
      %261 = vmatpush2.msra.mxu0 0.0
      %262 = vmatprep.subr.mxu0 0.0
      %263 = vmatpush2.msra.mxu0 0.0
      %264 = vmatprep.subr.mxu0 0.0
      %265 = vmatpush2.msra.mxu0 0.0
      %266 = vmatprep.subr.mxu0 0.0
      %267 = vmatpush2.msra.mxu0 0.0
      %268 = vmatprep.subr.mxu0 0.0
      %269 = vmatpush2.msra.mxu0 0.0
      %270 = vmatprep.subr.mxu0 0.0
      %271 = vmatpush2.msra.mxu0 0.0
      %272 = vmatprep.subr.mxu0 0.0
      %273 = vmatpush2.msra.mxu0 0.0
      %274 = vmatprep.subr.mxu0 0.0
      %275 = vmatpush2.msra.mxu0 0.0
      %276 = vmatprep.mubr.f32.mxu0 0.0
      %277 = vmatmul.mubr.f32.gmra.mxu0 %v147
      %v278 = vpop.f32.mrf.mxu0
      %v279 = vadd.f32 0.0, %v278
      %v280 = vpop.f32.mrf.mxu0
      %v281 = vadd.f32 0.0, %v280
      %282 = vdwg.mxu0
      %283 = vmatprep.subr.mxu0 %v211
      %284 = vmatpush1.msra.mxu0 %v210
      %285 = vmatprep.subr.mxu0 %v207
      %286 = vmatpush1.msra.mxu0 %v206
      %287 = vmatprep.subr.mxu0 %v203
      %288 = vmatpush1.msra.mxu0 %v202
      %289 = vmatprep.subr.mxu0 %v199
      %290 = vmatpush1.msra.mxu0 %v198
      %291 = vmatprep.subr.mxu0 %v195
      %292 = vmatpush1.msra.mxu0 %v194
      %293 = vmatprep.subr.mxu0 %v191
      %294 = vmatpush1.msra.mxu0 %v190
      %295 = vmatprep.subr.mxu0 %v187
      %296 = vmatpush1.msra.mxu0 %v186
      %297 = vmatprep.subr.mxu0 %v183
      %298 = vmatpush1.msra.mxu0 %v182
      %299 = vmatprep.subr.mxu0 %v179
      %300 = vmatpush1.msra.mxu0 %v178
      %301 = vmatprep.subr.mxu0 %v175
      %302 = vmatpush1.msra.mxu0 %v174
      %303 = vmatprep.subr.mxu0 %v171
      %304 = vmatpush1.msra.mxu0 %v170
      %305 = vmatprep.subr.mxu0 %v167
      %306 = vmatpush1.msra.mxu0 %v166
      %307 = vmatprep.subr.mxu0 %v163
      %308 = vmatpush1.msra.mxu0 %v162
      %309 = vmatprep.subr.mxu0 %v159
      %310 = vmatpush1.msra.mxu0 %v158
      %311 = vmatprep.subr.mxu0 %v155
      %312 = vmatpush1.msra.mxu0 %v154
      %313 = vmatprep.subr.mxu0 %v151
      %314 = vmatpush1.msra.mxu0 %v150
      %315 = vmatprep.subr.mxu0 0.0
      %316 = vmatpush2.msra.mxu0 0.0
      %317 = vmatprep.subr.mxu0 0.0
      %318 = vmatpush2.msra.mxu0 0.0
      %319 = vmatprep.subr.mxu0 0.0
      %320 = vmatpush2.msra.mxu0 0.0
      %321 = vmatprep.subr.mxu0 0.0
      %322 = vmatpush2.msra.mxu0 0.0
      %323 = vmatprep.subr.mxu0 0.0
      %324 = vmatpush2.msra.mxu0 0.0
      %325 = vmatprep.subr.mxu0 0.0
      %326 = vmatpush2.msra.mxu0 0.0
      %327 = vmatprep.subr.mxu0 0.0
      %328 = vmatpush2.msra.mxu0 0.0
      %329 = vmatprep.subr.mxu0 0.0
      %330 = vmatpush2.msra.mxu0 0.0
      %331 = vmatprep.subr.mxu0 0.0
      %332 = vmatpush2.msra.mxu0 0.0
      %333 = vmatprep.subr.mxu0 0.0
      %334 = vmatpush2.msra.mxu0 0.0
      %335 = vmatprep.subr.mxu0 0.0
      %336 = vmatpush2.msra.mxu0 0.0
      %337 = vmatprep.subr.mxu0 0.0
      %338 = vmatpush2.msra.mxu0 0.0
      %339 = vmatprep.subr.mxu0 0.0
      %340 = vmatpush2.msra.mxu0 0.0
      %341 = vmatprep.subr.mxu0 0.0
      %342 = vmatpush2.msra.mxu0 0.0
      %343 = vmatprep.subr.mxu0 0.0
      %344 = vmatpush2.msra.mxu0 0.0
      %345 = vmatprep.subr.mxu0 0.0
      %346 = vmatpush2.msra.mxu0 0.0
      %347 = vmatprep.mubr.f32.mxu0 0.0
      %348 = vmatmul.mubr.f32.gmra.mxu0 %v147
      %v349 = vpop.f32.mrf.mxu0
      %v350 = vadd.f32 0.0, %v349
      %v351 = vpop.f32.mrf.mxu0
      %v352 = vadd.f32 0.0, %v351
      %353 = vdwg.mxu0
      %v354 = vld [vmem:[%s4] sm:$0x3]
      %v356 = vlaneseq
      %v357 = vshrl.u32 %v356, 7
      %v358 = vsub.s32 0, %v357
      %v359 = vrot.slane %v354, %v358
      %v360 = vlaneseq
      %v361 = vshrl.u32 %v360, 7
      %v362 = vsub.s32 1, %v361
      %v363 = vrot.slane %v354, %v362
      %v366 = vadd.f32 %v279, %v359
      %v367 = vadd.f32 %v281, %v363
      %v368 = vtanh.pop %v366
      %v369 = vtanh.pop %v367
      %v370 = vmul.f32 %v368, 0.5
      %v371 = vmul.f32 %v369, 0.5
      %v372 = vadd.f32 %v370, 0.5
      %v373 = vadd.f32 %v371, 0.5
      %v374 = vmul.f32 %v372, %v50
      %376 = vrot.lane.b32.xlu0 %v369, 64
      %v377 = vpop.permute.xlu0 %376
      %v379 = vmul.f32 %v372, %v377
      %381 = vrot.lane.b32.xlu0 %v379, 64
      %v382 = vpop.permute.xlu0 %381
      %v384 = vadd.f32 %v374, %v382
      %v385 = vtanh.pop %v384
      %387 = vrot.lane.b32.xlu0 %v385, 64
      %v388 = vpop.permute.xlu0 %387
      %v390 = vmul.f32 %v373, %v388
      %v391 = vadd.f32 %v111, %v350
      %v392 = vadd.f32 %v112, %v352
      %v393 = vtanh.pop %v391
      %v394 = vtanh.pop %v392
      %v395 = vmul.f32 %v393, 0.5
      %v396 = vmul.f32 %v394, 0.5
      %v397 = vadd.f32 %v395, 0.5
      %v398 = vadd.f32 %v396, 0.5
      %v399 = vmul.f32 %v397, %v135
      %401 = vrot.lane.b32.xlu0 %v394, 64
      %v402 = vpop.permute.xlu0 %401
      %v404 = vmul.f32 %v397, %v402
      %406 = vrot.lane.b32.xlu0 %v404, 64
      %v407 = vpop.permute.xlu0 %406
      %v409 = vadd.f32 %v399, %v407
      %v410 = vtanh.pop %v409
      %412 = vrot.lane.b32.xlu0 %v410, 64
      %v413 = vpop.permute.xlu0 %412
      %v415 = vmul.f32 %v398, %v413
      %417 = vrot.lane.b32.xlu0 %v390, 64
      %v418 = vpop.permute.xlu0 %417
      %v420 = vsel %vm146, %v415, %v418
      %421 = vmatprep.subr.mxu0 %v209
      %422 = vmatpush1.msra.mxu0 %v208
      %423 = vmatprep.subr.mxu0 %v205
      %424 = vmatpush1.msra.mxu0 %v204
      %425 = vmatprep.subr.mxu0 %v201
      %426 = vmatpush1.msra.mxu0 %v200
      %427 = vmatprep.subr.mxu0 %v197
      %428 = vmatpush1.msra.mxu0 %v196
      %429 = vmatprep.subr.mxu0 %v193
      %430 = vmatpush1.msra.mxu0 %v192
      %431 = vmatprep.subr.mxu0 %v189
      %432 = vmatpush1.msra.mxu0 %v188
      %433 = vmatprep.subr.mxu0 %v185
      %434 = vmatpush1.msra.mxu0 %v184
      %435 = vmatprep.subr.mxu0 %v181
      %436 = vmatpush1.msra.mxu0 %v180
      %437 = vmatprep.subr.mxu0 %v177
      %438 = vmatpush1.msra.mxu0 %v176
      %439 = vmatprep.subr.mxu0 %v173
      %440 = vmatpush1.msra.mxu0 %v172
      %441 = vmatprep.subr.mxu0 %v169
      %442 = vmatpush1.msra.mxu0 %v168
      %443 = vmatprep.subr.mxu0 %v165
      %444 = vmatpush1.msra.mxu0 %v164
      %445 = vmatprep.subr.mxu0 %v161
      %446 = vmatpush1.msra.mxu0 %v160
      %447 = vmatprep.subr.mxu0 %v157
      %448 = vmatpush1.msra.mxu0 %v156
      %449 = vmatprep.subr.mxu0 %v153
      %450 = vmatpush1.msra.mxu0 %v152
      %451 = vmatprep.subr.mxu0 %v149
      %452 = vmatpush1.msra.mxu0 %v148
      %453 = vmatprep.subr.mxu0 0.0
      %454 = vmatpush2.msra.mxu0 0.0
      %455 = vmatprep.subr.mxu0 0.0
      %456 = vmatpush2.msra.mxu0 0.0
      %457 = vmatprep.subr.mxu0 0.0
      %458 = vmatpush2.msra.mxu0 0.0
      %459 = vmatprep.subr.mxu0 0.0
      %460 = vmatpush2.msra.mxu0 0.0
      %461 = vmatprep.subr.mxu0 0.0
      %462 = vmatpush2.msra.mxu0 0.0
      %463 = vmatprep.subr.mxu0 0.0
      %464 = vmatpush2.msra.mxu0 0.0
      %465 = vmatprep.subr.mxu0 0.0
      %466 = vmatpush2.msra.mxu0 0.0
      %467 = vmatprep.subr.mxu0 0.0
      %468 = vmatpush2.msra.mxu0 0.0
      %469 = vmatprep.subr.mxu0 0.0
      %470 = vmatpush2.msra.mxu0 0.0
      %471 = vmatprep.subr.mxu0 0.0
      %472 = vmatpush2.msra.mxu0 0.0
      %473 = vmatprep.subr.mxu0 0.0
      %474 = vmatpush2.msra.mxu0 0.0
      %475 = vmatprep.subr.mxu0 0.0
      %476 = vmatpush2.msra.mxu0 0.0
      %477 = vmatprep.subr.mxu0 0.0
      %478 = vmatpush2.msra.mxu0 0.0
      %479 = vmatprep.subr.mxu0 0.0
      %480 = vmatpush2.msra.mxu0 0.0
      %481 = vmatprep.subr.mxu0 0.0
      %482 = vmatpush2.msra.mxu0 0.0
      %483 = vmatprep.subr.mxu0 0.0
      %484 = vmatpush2.msra.mxu0 0.0
      %485 = vmatprep.mubr.f32.mxu0 0.0
      %486 = vmatmul.mubr.f32.gmra.mxu0 %v420
      %v487 = vpop.f32.mrf.mxu0
      %v488 = vadd.f32 0.0, %v487
      %v489 = vpop.f32.mrf.mxu0
      %v490 = vadd.f32 0.0, %v489
      %491 = vdwg.mxu0
      %492 = vmatprep.subr.mxu0 %v211
      %493 = vmatpush1.msra.mxu0 %v210
      %494 = vmatprep.subr.mxu0 %v207
      %495 = vmatpush1.msra.mxu0 %v206
      %496 = vmatprep.subr.mxu0 %v203
      %497 = vmatpush1.msra.mxu0 %v202
      %498 = vmatprep.subr.mxu0 %v199
      %499 = vmatpush1.msra.mxu0 %v198
      %500 = vmatprep.subr.mxu0 %v195
      %501 = vmatpush1.msra.mxu0 %v194
      %502 = vmatprep.subr.mxu0 %v191
      %503 = vmatpush1.msra.mxu0 %v190
      %504 = vmatprep.subr.mxu0 %v187
      %505 = vmatpush1.msra.mxu0 %v186
      %506 = vmatprep.subr.mxu0 %v183
      %507 = vmatpush1.msra.mxu0 %v182
      %508 = vmatprep.subr.mxu0 %v179
      %509 = vmatpush1.msra.mxu0 %v178
      %510 = vmatprep.subr.mxu0 %v175
      %511 = vmatpush1.msra.mxu0 %v174
      %512 = vmatprep.subr.mxu0 %v171
      %513 = vmatpush1.msra.mxu0 %v170
      %514 = vmatprep.subr.mxu0 %v167
      %515 = vmatpush1.msra.mxu0 %v166
      %516 = vmatprep.subr.mxu0 %v163
      %517 = vmatpush1.msra.mxu0 %v162
      %518 = vmatprep.subr.mxu0 %v159
      %519 = vmatpush1.msra.mxu0 %v158
      %520 = vmatprep.subr.mxu0 %v155
      %521 = vmatpush1.msra.mxu0 %v154
      %522 = vmatprep.subr.mxu0 %v151
      %523 = vmatpush1.msra.mxu0 %v150
      %524 = vmatprep.subr.mxu0 0.0
      %525 = vmatpush2.msra.mxu0 0.0
      %526 = vmatprep.subr.mxu0 0.0
      %527 = vmatpush2.msra.mxu0 0.0
      %528 = vmatprep.subr.mxu0 0.0
      %529 = vmatpush2.msra.mxu0 0.0
      %530 = vmatprep.subr.mxu0 0.0
      %531 = vmatpush2.msra.mxu0 0.0
      %532 = vmatprep.subr.mxu0 0.0
      %533 = vmatpush2.msra.mxu0 0.0
      %534 = vmatprep.subr.mxu0 0.0
      %535 = vmatpush2.msra.mxu0 0.0
      %536 = vmatprep.subr.mxu0 0.0
      %537 = vmatpush2.msra.mxu0 0.0
      %538 = vmatprep.subr.mxu0 0.0
      %539 = vmatpush2.msra.mxu0 0.0
      %540 = vmatprep.subr.mxu0 0.0
      %541 = vmatpush2.msra.mxu0 0.0
      %542 = vmatprep.subr.mxu0 0.0
      %543 = vmatpush2.msra.mxu0 0.0
      %544 = vmatprep.subr.mxu0 0.0
      %545 = vmatpush2.msra.mxu0 0.0
      %546 = vmatprep.subr.mxu0 0.0
      %547 = vmatpush2.msra.mxu0 0.0
      %548 = vmatprep.subr.mxu0 0.0
      %549 = vmatpush2.msra.mxu0 0.0
      %550 = vmatprep.subr.mxu0 0.0
      %551 = vmatpush2.msra.mxu0 0.0
      %552 = vmatprep.subr.mxu0 0.0
      %553 = vmatpush2.msra.mxu0 0.0
      %554 = vmatprep.subr.mxu0 0.0
      %555 = vmatpush2.msra.mxu0 0.0
      %556 = vmatprep.mubr.f32.mxu0 0.0
      %557 = vmatmul.mubr.f32.gmra.mxu0 %v420
      %v558 = vpop.f32.mrf.mxu0
      %v559 = vadd.f32 0.0, %v558
      %v560 = vpop.f32.mrf.mxu0
      %v561 = vadd.f32 0.0, %v560
      %562 = vdwg.mxu0
      %v563 = vadd.f32 %v488, %v359
      %v564 = vadd.f32 %v490, %v363
      %v565 = vtanh.pop %v563
      %v566 = vtanh.pop %v564
      %v567 = vmul.f32 %v565, 0.5
      %v568 = vmul.f32 %v566, 0.5
      %v569 = vadd.f32 %v567, 0.5
      %v570 = vadd.f32 %v568, 0.5
      %v571 = vmul.f32 %v569, %v384
      %573 = vrot.lane.b32.xlu0 %v566, 64
      %v574 = vpop.permute.xlu0 %573
      %v576 = vmul.f32 %v569, %v574
      %578 = vrot.lane.b32.xlu0 %v576, 64
      %v579 = vpop.permute.xlu0 %578
      %v581 = vadd.f32 %v571, %v579
      %v582 = vtanh.pop %v581
      %584 = vrot.lane.b32.xlu0 %v582, 64
      %v585 = vpop.permute.xlu0 %584
      %v587 = vmul.f32 %v570, %v585
      %v588 = vadd.f32 %v113, %v559
      %v589 = vadd.f32 %v114, %v561
      %v590 = vtanh.pop %v588
      %v591 = vtanh.pop %v589
      %v592 = vmul.f32 %v590, 0.5
      %v593 = vmul.f32 %v591, 0.5
      %v594 = vadd.f32 %v592, 0.5
      %v595 = vadd.f32 %v593, 0.5
      %v596 = vmul.f32 %v594, %v409
      %598 = vrot.lane.b32.xlu0 %v591, 64
      %v599 = vpop.permute.xlu0 %598
      %v601 = vmul.f32 %v594, %v599
      %603 = vrot.lane.b32.xlu0 %v601, 64
      %v604 = vpop.permute.xlu0 %603
      %v606 = vadd.f32 %v596, %v604
      %v607 = vtanh.pop %v606
      %609 = vrot.lane.b32.xlu0 %v607, 64
      %v610 = vpop.permute.xlu0 %609
      %v612 = vmul.f32 %v595, %v610
      %614 = vrot.lane.b32.xlu0 %v587, 64
      %v615 = vpop.permute.xlu0 %614
      %v617 = vsel %vm146, %v612, %v615
      %618 = vmatprep.subr.mxu0 %v209
      %619 = vmatpush1.msra.mxu0 %v208
      %620 = vmatprep.subr.mxu0 %v205
      %621 = vmatpush1.msra.mxu0 %v204
      %622 = vmatprep.subr.mxu0 %v201
      %623 = vmatpush1.msra.mxu0 %v200
      %624 = vmatprep.subr.mxu0 %v197
      %625 = vmatpush1.msra.mxu0 %v196
      %626 = vmatprep.subr.mxu0 %v193
      %627 = vmatpush1.msra.mxu0 %v192
      %628 = vmatprep.subr.mxu0 %v189
      %629 = vmatpush1.msra.mxu0 %v188
      %630 = vmatprep.subr.mxu0 %v185
      %631 = vmatpush1.msra.mxu0 %v184
      %632 = vmatprep.subr.mxu0 %v181
      %633 = vmatpush1.msra.mxu0 %v180
      %634 = vmatprep.subr.mxu0 %v177
      %635 = vmatpush1.msra.mxu0 %v176
      %636 = vmatprep.subr.mxu0 %v173
      %637 = vmatpush1.msra.mxu0 %v172
      %638 = vmatprep.subr.mxu0 %v169
      %639 = vmatpush1.msra.mxu0 %v168
      %640 = vmatprep.subr.mxu0 %v165
      %641 = vmatpush1.msra.mxu0 %v164
      %642 = vmatprep.subr.mxu0 %v161
      %643 = vmatpush1.msra.mxu0 %v160
      %644 = vmatprep.subr.mxu0 %v157
      %645 = vmatpush1.msra.mxu0 %v156
      %646 = vmatprep.subr.mxu0 %v153
      %647 = vmatpush1.msra.mxu0 %v152
      %648 = vmatprep.subr.mxu0 %v149
      %649 = vmatpush1.msra.mxu0 %v148
      %650 = vmatprep.subr.mxu0 0.0
      %651 = vmatpush2.msra.mxu0 0.0
      %652 = vmatprep.subr.mxu0 0.0
      %653 = vmatpush2.msra.mxu0 0.0
      %654 = vmatprep.subr.mxu0 0.0
      %655 = vmatpush2.msra.mxu0 0.0
      %656 = vmatprep.subr.mxu0 0.0
      %657 = vmatpush2.msra.mxu0 0.0
      %658 = vmatprep.subr.mxu0 0.0
      %659 = vmatpush2.msra.mxu0 0.0
      %660 = vmatprep.subr.mxu0 0.0
      %661 = vmatpush2.msra.mxu0 0.0
      %662 = vmatprep.subr.mxu0 0.0
      %663 = vmatpush2.msra.mxu0 0.0
      %664 = vmatprep.subr.mxu0 0.0
      %665 = vmatpush2.msra.mxu0 0.0
      %666 = vmatprep.subr.mxu0 0.0
      %667 = vmatpush2.msra.mxu0 0.0
      %668 = vmatprep.subr.mxu0 0.0
      %669 = vmatpush2.msra.mxu0 0.0
      %670 = vmatprep.subr.mxu0 0.0
      %671 = vmatpush2.msra.mxu0 0.0
      %672 = vmatprep.subr.mxu0 0.0
      %673 = vmatpush2.msra.mxu0 0.0
      %674 = vmatprep.subr.mxu0 0.0
      %675 = vmatpush2.msra.mxu0 0.0
      %676 = vmatprep.subr.mxu0 0.0
      %677 = vmatpush2.msra.mxu0 0.0
      %678 = vmatprep.subr.mxu0 0.0
      %679 = vmatpush2.msra.mxu0 0.0
      %680 = vmatprep.subr.mxu0 0.0
      %681 = vmatpush2.msra.mxu0 0.0
      %682 = vmatprep.mubr.f32.mxu0 0.0
      %683 = vmatmul.mubr.f32.gmra.mxu0 %v617
      %v684 = vpop.f32.mrf.mxu0
      %v685 = vadd.f32 0.0, %v684
      %v686 = vpop.f32.mrf.mxu0
      %v687 = vadd.f32 0.0, %v686
      %688 = vdwg.mxu0
      %689 = vmatprep.subr.mxu0 %v211
      %690 = vmatpush1.msra.mxu0 %v210
      %691 = vmatprep.subr.mxu0 %v207
      %692 = vmatpush1.msra.mxu0 %v206
      %693 = vmatprep.subr.mxu0 %v203
      %694 = vmatpush1.msra.mxu0 %v202
      %695 = vmatprep.subr.mxu0 %v199
      %696 = vmatpush1.msra.mxu0 %v198
      %697 = vmatprep.subr.mxu0 %v195
      %698 = vmatpush1.msra.mxu0 %v194
      %699 = vmatprep.subr.mxu0 %v191
      %700 = vmatpush1.msra.mxu0 %v190
      %701 = vmatprep.subr.mxu0 %v187
      %702 = vmatpush1.msra.mxu0 %v186
      %703 = vmatprep.subr.mxu0 %v183
      %704 = vmatpush1.msra.mxu0 %v182
      %705 = vmatprep.subr.mxu0 %v179
      %706 = vmatpush1.msra.mxu0 %v178
      %707 = vmatprep.subr.mxu0 %v175
      %708 = vmatpush1.msra.mxu0 %v174
      %709 = vmatprep.subr.mxu0 %v171
      %710 = vmatpush1.msra.mxu0 %v170
      %711 = vmatprep.subr.mxu0 %v167
      %712 = vmatpush1.msra.mxu0 %v166
      %713 = vmatprep.subr.mxu0 %v163
      %714 = vmatpush1.msra.mxu0 %v162
      %715 = vmatprep.subr.mxu0 %v159
      %716 = vmatpush1.msra.mxu0 %v158
      %717 = vmatprep.subr.mxu0 %v155
      %718 = vmatpush1.msra.mxu0 %v154
      %719 = vmatprep.subr.mxu0 %v151
      %720 = vmatpush1.msra.mxu0 %v150
      %721 = vmatprep.subr.mxu0 0.0
      %722 = vmatpush2.msra.mxu0 0.0
      %723 = vmatprep.subr.mxu0 0.0
      %724 = vmatpush2.msra.mxu0 0.0
      %725 = vmatprep.subr.mxu0 0.0
      %726 = vmatpush2.msra.mxu0 0.0
      %727 = vmatprep.subr.mxu0 0.0
      %728 = vmatpush2.msra.mxu0 0.0
      %729 = vmatprep.subr.mxu0 0.0
      %730 = vmatpush2.msra.mxu0 0.0
      %731 = vmatprep.subr.mxu0 0.0
      %732 = vmatpush2.msra.mxu0 0.0
      %733 = vmatprep.subr.mxu0 0.0
      %734 = vmatpush2.msra.mxu0 0.0
      %735 = vmatprep.subr.mxu0 0.0
      %736 = vmatpush2.msra.mxu0 0.0
      %737 = vmatprep.subr.mxu0 0.0
      %738 = vmatpush2.msra.mxu0 0.0
      %739 = vmatprep.subr.mxu0 0.0
      %740 = vmatpush2.msra.mxu0 0.0
      %741 = vmatprep.subr.mxu0 0.0
      %742 = vmatpush2.msra.mxu0 0.0
      %743 = vmatprep.subr.mxu0 0.0
      %744 = vmatpush2.msra.mxu0 0.0
      %745 = vmatprep.subr.mxu0 0.0
      %746 = vmatpush2.msra.mxu0 0.0
      %747 = vmatprep.subr.mxu0 0.0
      %748 = vmatpush2.msra.mxu0 0.0
      %749 = vmatprep.subr.mxu0 0.0
      %750 = vmatpush2.msra.mxu0 0.0
      %751 = vmatprep.subr.mxu0 0.0
      %752 = vmatpush2.msra.mxu0 0.0
      %753 = vmatprep.mubr.f32.mxu0 0.0
      %754 = vmatmul.mubr.f32.gmra.mxu0 %v617
      %v755 = vpop.f32.mrf.mxu0
      %v756 = vadd.f32 0.0, %v755
      %v757 = vpop.f32.mrf.mxu0
      %v758 = vadd.f32 0.0, %v757
      %759 = vdwg.mxu0
      %v760 = vadd.f32 %v685, %v359
      %v761 = vadd.f32 %v687, %v363
      %v762 = vtanh.pop %v760
      %v763 = vtanh.pop %v761
      %v764 = vmul.f32 %v762, 0.5
      %v765 = vmul.f32 %v763, 0.5
      %v766 = vadd.f32 %v764, 0.5
      %v767 = vadd.f32 %v765, 0.5
      %v768 = vmul.f32 %v766, %v581
      %770 = vrot.lane.b32.xlu0 %v763, 64
      %v771 = vpop.permute.xlu0 %770
      %v773 = vmul.f32 %v766, %v771
      %775 = vrot.lane.b32.xlu0 %v773, 64
      %v776 = vpop.permute.xlu0 %775
      %v778 = vadd.f32 %v768, %v776
      %v779 = vtanh.pop %v778
      %781 = vrot.lane.b32.xlu0 %v779, 64
      %v782 = vpop.permute.xlu0 %781
      %v784 = vmul.f32 %v767, %v782
      %v785 = vadd.f32 %v115, %v756
      %v786 = vadd.f32 %v116, %v758
      %v787 = vtanh.pop %v785
      %v788 = vtanh.pop %v786
      %v789 = vmul.f32 %v787, 0.5
      %v790 = vmul.f32 %v788, 0.5
      %v791 = vadd.f32 %v789, 0.5
      %v792 = vadd.f32 %v790, 0.5
      %v793 = vmul.f32 %v791, %v606
      %795 = vrot.lane.b32.xlu0 %v788, 64
      %v796 = vpop.permute.xlu0 %795
      %v798 = vmul.f32 %v791, %v796
      %800 = vrot.lane.b32.xlu0 %v798, 64
      %v801 = vpop.permute.xlu0 %800
      %v803 = vadd.f32 %v793, %v801
      %v804 = vtanh.pop %v803
      %806 = vrot.lane.b32.xlu0 %v804, 64
      %v807 = vpop.permute.xlu0 %806
      %v809 = vmul.f32 %v792, %v807
      %811 = vrot.lane.b32.xlu0 %v784, 64
      %v812 = vpop.permute.xlu0 %811
      %v814 = vsel %vm146, %v809, %v812
      %815 = vmatprep.subr.mxu0 %v209
      %816 = vmatpush1.msra.mxu0 %v208
      %817 = vmatprep.subr.mxu0 %v205
      %818 = vmatpush1.msra.mxu0 %v204
      %819 = vmatprep.subr.mxu0 %v201
      %820 = vmatpush1.msra.mxu0 %v200
      %821 = vmatprep.subr.mxu0 %v197
      %822 = vmatpush1.msra.mxu0 %v196
      %823 = vmatprep.subr.mxu0 %v193
      %824 = vmatpush1.msra.mxu0 %v192
      %825 = vmatprep.subr.mxu0 %v189
      %826 = vmatpush1.msra.mxu0 %v188
      %827 = vmatprep.subr.mxu0 %v185
      %828 = vmatpush1.msra.mxu0 %v184
      %829 = vmatprep.subr.mxu0 %v181
      %830 = vmatpush1.msra.mxu0 %v180
      %831 = vmatprep.subr.mxu0 %v177
      %832 = vmatpush1.msra.mxu0 %v176
      %833 = vmatprep.subr.mxu0 %v173
      %834 = vmatpush1.msra.mxu0 %v172
      %835 = vmatprep.subr.mxu0 %v169
      %836 = vmatpush1.msra.mxu0 %v168
      %837 = vmatprep.subr.mxu0 %v165
      %838 = vmatpush1.msra.mxu0 %v164
      %839 = vmatprep.subr.mxu0 %v161
      %840 = vmatpush1.msra.mxu0 %v160
      %841 = vmatprep.subr.mxu0 %v157
      %842 = vmatpush1.msra.mxu0 %v156
      %843 = vmatprep.subr.mxu0 %v153
      %844 = vmatpush1.msra.mxu0 %v152
      %845 = vmatprep.subr.mxu0 %v149
      %846 = vmatpush1.msra.mxu0 %v148
      %847 = vmatprep.subr.mxu0 0.0
      %848 = vmatpush2.msra.mxu0 0.0
      %849 = vmatprep.subr.mxu0 0.0
      %850 = vmatpush2.msra.mxu0 0.0
      %851 = vmatprep.subr.mxu0 0.0
      %852 = vmatpush2.msra.mxu0 0.0
      %853 = vmatprep.subr.mxu0 0.0
      %854 = vmatpush2.msra.mxu0 0.0
      %855 = vmatprep.subr.mxu0 0.0
      %856 = vmatpush2.msra.mxu0 0.0
      %857 = vmatprep.subr.mxu0 0.0
      %858 = vmatpush2.msra.mxu0 0.0
      %859 = vmatprep.subr.mxu0 0.0
      %860 = vmatpush2.msra.mxu0 0.0
      %861 = vmatprep.subr.mxu0 0.0
      %862 = vmatpush2.msra.mxu0 0.0
      %863 = vmatprep.subr.mxu0 0.0
      %864 = vmatpush2.msra.mxu0 0.0
      %865 = vmatprep.subr.mxu0 0.0
      %866 = vmatpush2.msra.mxu0 0.0
      %867 = vmatprep.subr.mxu0 0.0
      %868 = vmatpush2.msra.mxu0 0.0
      %869 = vmatprep.subr.mxu0 0.0
      %870 = vmatpush2.msra.mxu0 0.0
      %871 = vmatprep.subr.mxu0 0.0
      %872 = vmatpush2.msra.mxu0 0.0
      %873 = vmatprep.subr.mxu0 0.0
      %874 = vmatpush2.msra.mxu0 0.0
      %875 = vmatprep.subr.mxu0 0.0
      %876 = vmatpush2.msra.mxu0 0.0
      %877 = vmatprep.subr.mxu0 0.0
      %878 = vmatpush2.msra.mxu0 0.0
      %879 = vmatprep.mubr.f32.mxu0 0.0
      %880 = vmatmul.mubr.f32.gmra.mxu0 %v814
      %v881 = vpop.f32.mrf.mxu0
      %v882 = vadd.f32 0.0, %v881
      %v883 = vpop.f32.mrf.mxu0
      %v884 = vadd.f32 0.0, %v883
      %885 = vdwg.mxu0
      %886 = vmatprep.subr.mxu0 %v211
      %887 = vmatpush1.msra.mxu0 %v210
      %888 = vmatprep.subr.mxu0 %v207
      %889 = vmatpush1.msra.mxu0 %v206
      %890 = vmatprep.subr.mxu0 %v203
      %891 = vmatpush1.msra.mxu0 %v202
      %892 = vmatprep.subr.mxu0 %v199
      %893 = vmatpush1.msra.mxu0 %v198
      %894 = vmatprep.subr.mxu0 %v195
      %895 = vmatpush1.msra.mxu0 %v194
      %896 = vmatprep.subr.mxu0 %v191
      %897 = vmatpush1.msra.mxu0 %v190
      %898 = vmatprep.subr.mxu0 %v187
      %899 = vmatpush1.msra.mxu0 %v186
      %900 = vmatprep.subr.mxu0 %v183
      %901 = vmatpush1.msra.mxu0 %v182
      %902 = vmatprep.subr.mxu0 %v179
      %903 = vmatpush1.msra.mxu0 %v178
      %904 = vmatprep.subr.mxu0 %v175
      %905 = vmatpush1.msra.mxu0 %v174
      %906 = vmatprep.subr.mxu0 %v171
      %907 = vmatpush1.msra.mxu0 %v170
      %908 = vmatprep.subr.mxu0 %v167
      %909 = vmatpush1.msra.mxu0 %v166
      %910 = vmatprep.subr.mxu0 %v163
      %911 = vmatpush1.msra.mxu0 %v162
      %912 = vmatprep.subr.mxu0 %v159
      %913 = vmatpush1.msra.mxu0 %v158
      %914 = vmatprep.subr.mxu0 %v155
      %915 = vmatpush1.msra.mxu0 %v154
      %916 = vmatprep.subr.mxu0 %v151
      %917 = vmatpush1.msra.mxu0 %v150
      %918 = vmatprep.subr.mxu0 0.0
      %919 = vmatpush2.msra.mxu0 0.0
      %920 = vmatprep.subr.mxu0 0.0
      %921 = vmatpush2.msra.mxu0 0.0
      %922 = vmatprep.subr.mxu0 0.0
      %923 = vmatpush2.msra.mxu0 0.0
      %924 = vmatprep.subr.mxu0 0.0
      %925 = vmatpush2.msra.mxu0 0.0
      %926 = vmatprep.subr.mxu0 0.0
      %927 = vmatpush2.msra.mxu0 0.0
      %928 = vmatprep.subr.mxu0 0.0
      %929 = vmatpush2.msra.mxu0 0.0
      %930 = vmatprep.subr.mxu0 0.0
      %931 = vmatpush2.msra.mxu0 0.0
      %932 = vmatprep.subr.mxu0 0.0
      %933 = vmatpush2.msra.mxu0 0.0
      %934 = vmatprep.subr.mxu0 0.0
      %935 = vmatpush2.msra.mxu0 0.0
      %936 = vmatprep.subr.mxu0 0.0
      %937 = vmatpush2.msra.mxu0 0.0
      %938 = vmatprep.subr.mxu0 0.0
      %939 = vmatpush2.msra.mxu0 0.0
      %940 = vmatprep.subr.mxu0 0.0
      %941 = vmatpush2.msra.mxu0 0.0
      %942 = vmatprep.subr.mxu0 0.0
      %943 = vmatpush2.msra.mxu0 0.0
      %944 = vmatprep.subr.mxu0 0.0
      %945 = vmatpush2.msra.mxu0 0.0
      %946 = vmatprep.subr.mxu0 0.0
      %947 = vmatpush2.msra.mxu0 0.0
      %948 = vmatprep.subr.mxu0 0.0
      %949 = vmatpush2.msra.mxu0 0.0
      %950 = vmatprep.mubr.f32.mxu0 0.0
      %951 = vmatmul.mubr.f32.gmra.mxu0 %v814
      %v952 = vpop.f32.mrf.mxu0
      %v953 = vadd.f32 0.0, %v952
      %v954 = vpop.f32.mrf.mxu0
      %v955 = vadd.f32 0.0, %v954
      %956 = vdwg.mxu0
      %v957 = vadd.f32 %v882, %v359
      %v958 = vadd.f32 %v884, %v363
      %v959 = vtanh.pop %v957
      %v960 = vtanh.pop %v958
      %v961 = vmul.f32 %v959, 0.5
      %v962 = vmul.f32 %v960, 0.5
      %v963 = vadd.f32 %v961, 0.5
      %v964 = vadd.f32 %v962, 0.5
      %v965 = vmul.f32 %v963, %v778
      %967 = vrot.lane.b32.xlu0 %v960, 64
      %v968 = vpop.permute.xlu0 %967
      %v970 = vmul.f32 %v963, %v968
      %972 = vrot.lane.b32.xlu0 %v970, 64
      %v973 = vpop.permute.xlu0 %972
      %v975 = vadd.f32 %v965, %v973
      %v976 = vtanh.pop %v975
      %978 = vrot.lane.b32.xlu0 %v976, 64
      %v979 = vpop.permute.xlu0 %978
      %v981 = vmul.f32 %v964, %v979
    $region38: #{tpu_custom_call.1} parent=1 // loop_footer
      %s45 = sadd.s32 1, %s41
    $region39: #{tpu_custom_call.1} parent=1 // loop_footer_branch
      %40 = sbr.rel target = $region35
    $region40: #{tpu_custom_call.1} parent=1 // loop_exit
      _
    %v982 = vmax.f32 %v49, 0.0
    %v983 = vld [vmem:[%s5] sm:$0xff]
    %v984 = vld [vmem:[%s5 + $0x8] sm:$0xff]
    %v985 = vld [vmem:[%s5 + $0x10] sm:$0xff]
    %v986 = vld [vmem:[%s5 + $0x18] sm:$0xff]
    %v987 = vld [vmem:[%s5 + $0x20] sm:$0xff]
    %v988 = vld [vmem:[%s5 + $0x28] sm:$0xff]
    %v989 = vld [vmem:[%s5 + $0x30] sm:$0xff]
    %v990 = vld [vmem:[%s5 + $0x38] sm:$0xff]
    %v991 = vld [vmem:[%s6] sm:$0x1]
    %v993 = vlaneseq
    %v994 = vshrl.u32 %v993, 7
    %v995 = vsub.s32 0, %v994
    %v996 = vrot.slane %v991, %v995
    %vm998 = vcmask 523264
    %v1000 = vsel %vm998, %v982, 0
    %1002 = vmatprep.subr.mxu0 0.0
    %1003 = vmatpush1.msra.mxu0 0.0
    %1004 = vmatprep.subr.mxu0 0.0
    %1005 = vmatpush1.msra.mxu0 0.0
    %1006 = vmatprep.subr.mxu0 0.0
    %1007 = vmatpush1.msra.mxu0 0.0
    %1008 = vmatprep.subr.mxu0 0.0
    %1009 = vmatpush1.msra.mxu0 0.0
    %1010 = vmatprep.subr.mxu0 0.0
    %1011 = vmatpush1.msra.mxu0 0.0
    %1012 = vmatprep.subr.mxu0 0.0
    %1013 = vmatpush1.msra.mxu0 0.0
    %1014 = vmatprep.subr.mxu0 0.0
    %1015 = vmatpush1.msra.mxu0 0.0
    %1016 = vmatprep.subr.mxu0 0.0
    %1017 = vmatpush1.msra.mxu0 0.0
    %1018 = vmatprep.subr.mxu0 0.0
    %1019 = vmatpush1.msra.mxu0 %v990
    %1020 = vmatprep.subr.mxu0 0.0
    %1021 = vmatpush1.msra.mxu0 %v989
    %1022 = vmatprep.subr.mxu0 0.0
    %1023 = vmatpush1.msra.mxu0 %v988
    %1024 = vmatprep.subr.mxu0 0.0
    %1025 = vmatpush1.msra.mxu0 %v987
    %1026 = vmatprep.subr.mxu0 0.0
    %1027 = vmatpush1.msra.mxu0 %v986
    %1028 = vmatprep.subr.mxu0 0.0
    %1029 = vmatpush1.msra.mxu0 %v985
    %1030 = vmatprep.subr.mxu0 0.0
    %1031 = vmatpush1.msra.mxu0 %v984
    %1032 = vmatprep.subr.mxu0 0.0
    %1033 = vmatpush1.msra.mxu0 %v983
    %1034 = vmatprep.subr.mxu0 0.0
    %1035 = vmatpush2.msra.mxu0 0.0
    %1036 = vmatprep.subr.mxu0 0.0
    %1037 = vmatpush2.msra.mxu0 0.0
    %1038 = vmatprep.subr.mxu0 0.0
    %1039 = vmatpush2.msra.mxu0 0.0
    %1040 = vmatprep.subr.mxu0 0.0
    %1041 = vmatpush2.msra.mxu0 0.0
    %1042 = vmatprep.subr.mxu0 0.0
    %1043 = vmatpush2.msra.mxu0 0.0
    %1044 = vmatprep.subr.mxu0 0.0
    %1045 = vmatpush2.msra.mxu0 0.0
    %1046 = vmatprep.subr.mxu0 0.0
    %1047 = vmatpush2.msra.mxu0 0.0
    %1048 = vmatprep.subr.mxu0 0.0
    %1049 = vmatpush2.msra.mxu0 0.0
    %1050 = vmatprep.subr.mxu0 0.0
    %1051 = vmatpush2.msra.mxu0 0.0
    %1052 = vmatprep.subr.mxu0 0.0
    %1053 = vmatpush2.msra.mxu0 0.0
    %1054 = vmatprep.subr.mxu0 0.0
    %1055 = vmatpush2.msra.mxu0 0.0
    %1056 = vmatprep.subr.mxu0 0.0
    %1057 = vmatpush2.msra.mxu0 0.0
    %1058 = vmatprep.subr.mxu0 0.0
    %1059 = vmatpush2.msra.mxu0 0.0
    %1060 = vmatprep.subr.mxu0 0.0
    %1061 = vmatpush2.msra.mxu0 0.0
    %1062 = vmatprep.subr.mxu0 0.0
    %1063 = vmatpush2.msra.mxu0 0.0
    %1064 = vmatprep.subr.mxu0 0.0
    %1065 = vmatpush2.msra.mxu0 0.0
    %1066 = vmatprep.mubr.f32.mxu0 0.0
    %1067 = vmatmul.mubr.f32.gmra.mxu0 %v1000
    %v1068 = vpop.f32.mrf.mxu0
    %v1069 = vadd.f32 %v996, %v1068
    %v1070 = vpop.f32.mrf.mxu0
    %1071 = vdwg.mxu0
    %vm1072 = vcmask 23552
    %v1073 = vsel %vm1072, %v1069, -inf
    %1074 = vmax.xlane.f32.xlu0 %v1073
    %v1075 = vpop.xlane.xlu0 %1074
    %v1076 = vsub.f32 %v1069, %v1075
    %v1077 = vmul.f32 %v1076, 1.442695
    %v1078 = vpow.pop %v1077
    %v1079 = vsel %vm1072, %v1078, 0.0
    %1080 = vadd.xlane.f32.xlu0 %v1079
    %v1081 = vpop.xlane.xlu0 %1080
    %v1082 = vrcp.pop %v1081
    %v1083 = vmul.f32 %v1078, %v1082
    %1084 = vst.msk [vmem:[%s7] sm:$0xff] %vm1072, %v1083
    // Predicated region
    $region41: #{tpu_custom_call.1} parent=1 // pred_check
      _
    $region42: #{tpu_custom_call.1} parent=1 // pred_check_branch
      %1086 = sbr.rel (0) target = $region44
    $region43: #{tpu_custom_call.1} parent=1 // pred_region
      _
    $region44: #{tpu_custom_call.1} parent=1 // pred_fallthru
      _
    // Predicated region
    $region45: #{tpu_custom_call.1} parent=1 // pred_check
      _
    $region46: #{tpu_custom_call.1} parent=1 // pred_check_branch
      %1088 = sbr.rel (0) target = $region48
    $region47: #{tpu_custom_call.1} parent=1 // pred_region
      _
    $region48: #{tpu_custom_call.1} parent=1 // pred_fallthru
      _
    %1089 = vsyncpa [#allocation3], 1

</llo_original>
